<compile_context>
chip_gen: v7x
topology: tpu7x:2x2x1
jax: 0.10.0
libtpu: 0.0.40
codegen_flags: <defaults>
</compile_context>

<pallas_src>
import functools

import jax
import jax.numpy as jnp
from jax.experimental import pallas as pl
from jax.experimental.pallas import tpu as pltpu


def _round_up(x, m):
    return ((x + m - 1) // m) * m


def _num_tensorcores():
    """Best-effort TensorCore-per-device count (2 on v7x / megacore chips)."""
    try:
        kind = jax.devices()[0].device_kind.lower()
    except Exception:
        return 1
    return 2 if ("v7" in kind or "v4" in kind or "v5p" in kind) else 1


def _mlp_kernel(x_ref, w1_ref, b1_ref, w2_ref, b2_ref, w3_ref, b3_ref, o_ref):
    cdt = w1_ref.dtype  # compute dtype of the matmuls (bf16 or f32)
    x = x_ref[...].astype(cdt)  # cast inside the kernel: no wrapper pass over x
    # fc1 + ReLU (f32 MXU accumulation, f32 bias/activation)
    h1 = jnp.dot(x, w1_ref[...], preferred_element_type=jnp.float32)
    h1 = jnp.maximum(h1 + b1_ref[...], 0.0)
    # fc2 + ReLU
    h2 = jnp.dot(h1.astype(cdt), w2_ref[...], preferred_element_type=jnp.float32)
    h2 = jnp.maximum(h2 + b2_ref[...], 0.0)
    # fc3 (no activation)
    out = jnp.dot(h2.astype(cdt), w3_ref[...], preferred_element_type=jnp.float32)
    o_ref[...] = (out + b3_ref[...]).astype(o_ref.dtype)


@functools.partial(jax.jit, static_argnames=("block_b", "compute_dtype", "out_dtype"))
def qry_tower_forward(x, params, *, block_b=4096, compute_dtype=jnp.float32,
                      out_dtype=None):
    """Full QryTower forward as one fused Pallas kernel, tiled over batch.

    compute_dtype=jnp.bfloat16 enables the fast MXU path (f32 accumulation);
    out_dtype=jnp.bfloat16 additionally halves the output HBM stream.
    """
    w1, b1, w2, b2, w3, b3 = params
    B, d_in = x.shape
    d_h1 = w1.shape[1]
    d_h2 = w2.shape[1]
    d_out = w3.shape[1]

    cdt = jnp.dtype(compute_dtype)
    odt = jnp.dtype(out_dtype) if out_dtype is not None else x.dtype

    # Weights cast once (tiny, ~100 KiB); biases stay f32 for the f32 bias-add.
    w1c = w1.astype(cdt)
    w2c = w2.astype(cdt)
    w3c = w3.astype(cdt)
    b1f = b1.astype(jnp.float32)
    b2f = b2.astype(jnp.float32)
    b3f = b3.astype(jnp.float32)

    # --- batch tile selection --------------------------------------------------
    bb = max(8, min(block_b, _round_up(B, 8)))
    bb = _round_up(bb, 8)

    n_cores = _num_tensorcores()
    if n_cores > 1:
        # >=2 grid steps per TensorCore: the "parallel" axis shards across both
        # cores and each core still gets prefetch/writeback overlap.
        if B >= 8 * n_cores:
            bb = min(bb, _round_up(pl.cdiv(B, 2 * n_cores), 8))
    else:
        # Single TC (v5e/v6e): only shrink for DMA/compute overlap, and never
        # below 2048 rows -- don't pay per-step overhead just to get 2 steps.
        if B >= 2 * 2048:
            bb = min(bb, max(2048, _round_up(pl.cdiv(B, 2), 8)))

    # --- VMEM budget (v7x-safe: 64 MiB/core physical, leave headroom) ---------
    def _vmem_estimate(bb_):
        x_bytes = 2 * bb_ * d_in * x.dtype.itemsize          # double-buffered in
        o_bytes = 2 * bb_ * d_out * odt.itemsize              # double-buffered out
        act_bytes = bb_ * (d_h1 + d_h2 + d_out) * 4           # f32 intermediates
        w_bytes = 2 * ((d_in * d_h1 + d_h1 * d_h2 + d_h2 * d_out) * cdt.itemsize
                       + (d_h1 + d_h2 + d_out) * 4)
        return x_bytes + o_bytes + act_bytes + w_bytes

    _VMEM_BUDGET = 40 * 1024 * 1024
    while bb > 8 and _vmem_estimate(bb) > _VMEM_BUDGET:
        bb = max(8, _round_up(bb // 2, 8))

    grid = (pl.cdiv(B, bb),)

    def full2d(shape):
        # weights / biases fully resident each grid step (constant index_map)
        return pl.BlockSpec(shape, lambda i: (0, 0))

    # advisory cost estimate for XLA's scheduler
    flops = 2 * B * (d_in * d_h1 + d_h1 * d_h2 + d_h2 * d_out)
    w_hbm = ((d_in * d_h1 + d_h1 * d_h2 + d_h2 * d_out) * cdt.itemsize
             + (d_h1 + d_h2 + d_out) * 4)
    bytes_accessed = (B * d_in * x.dtype.itemsize
                      + B * d_out * odt.itemsize
                      + w_hbm)

    # NOTE: the last batch tile may be partial; rows beyond B are computed on
    # unspecified padded data and their outputs are dropped by Pallas. This is
    # correct under Pallas OOB/partial-block semantics -- do not "fix" it by
    # reading past B manually.
    out = pl.pallas_call(
        _mlp_kernel,
        out_shape=jax.ShapeDtypeStruct((B, d_out), odt),
        grid_spec=pltpu.PrefetchScalarGridSpec(
            num_scalar_prefetch=0,
            grid=grid,
            in_specs=[
                pl.BlockSpec((bb, d_in), lambda i: (i, 0)),  # x tile (unpadded)
                full2d((d_in, d_h1)),                        # W1
                full2d((1, d_h1)),                           # b1
                full2d((d_h1, d_h2)),                        # W2
                full2d((1, d_h2)),                           # b2
                full2d((d_h2, d_out)),                       # W3
                full2d((1, d_out)),                          # b3
            ],
            out_specs=pl.BlockSpec((bb, d_out), lambda i: (i, 0)),
        ),
        compiler_params=pltpu.CompilerParams(
            dimension_semantics=("parallel",),
            vmem_limit_bytes=48 * 1024 * 1024,
        ),
        cost_estimate=pl.CostEstimate(
            flops=flops, transcendentals=0, bytes_accessed=bytes_accessed),
    )(x, w1c, b1f, w2c, b2f, w3c, b3f)

    return out


def init_params(key, input_dim=100, hidden_dims=(128, 64), output_dim=100,
                dtype=jnp.float32):
    """Deterministic init mimicking torch.nn.Linear (uniform(+-1/sqrt(fan_in)))."""
    dims = [input_dim, hidden_dims[0], hidden_dims[1], output_dim]
    params = []
    for i in range(3):
        fan_in, fan_out = dims[i], dims[i + 1]
        key, kw, kb = jax.random.split(key, 3)
        bound = 1.0 / jnp.sqrt(fan_in)
        w = jax.random.uniform(kw, (fan_in, fan_out), dtype, -bound, bound)
        b = jax.random.uniform(kb, (1, fan_out), dtype, -bound, bound)
        params += [w, b]
    return tuple(params)


def reference_forward(x, params):
    w1, b1, w2, b2, w3, b3 = params
    h = jnp.maximum(x @ w1 + b1, 0.0)
    h = jnp.maximum(h @ w2 + b2, 0.0)
    return h @ w3 + b3


if __name__ == "__main__":
    key = jax.random.PRNGKey(0)
    key, kx = jax.random.split(key)

    batch = 64
    input_dim, hidden_dims, output_dim = 100, (128, 64), 100

    x = jax.random.normal(kx, (batch, input_dim), dtype=jnp.float32)
    params = init_params(key, input_dim, hidden_dims, output_dim)

    ref = reference_forward(x, params)

    # default path: f32 compute, f32 output -- matches PyTorch reference
    out_f32 = qry_tower_forward(x, params)
    out_f32 = jax.block_until_ready(out_f32)
    assert out_f32.shape == (batch, output_dim), out_f32.shape
    assert jnp.allclose(out_f32, ref, atol=1e-4, rtol=1e-4), "f32 mismatch vs JAX reference"

    # fast path: bf16 MXU compute (f32 accumulation), bf16 output -- loose tolerance
    out_bf16 = qry_tower_forward(x, params, compute_dtype=jnp.bfloat16,
                                 out_dtype=jnp.bfloat16)
    out_bf16 = jax.block_until_ready(out_bf16)
    assert out_bf16.shape == (batch, output_dim), out_bf16.shape
    assert jnp.allclose(out_bf16.astype(jnp.float32), ref, atol=7e-2, rtol=7e-2), \
        "bf16 mismatch vs JAX reference"

    print("KERNEL_OK")
</pallas_src>

<mosaic_0001>
module attributes {stable_mosaic.version = 11 : i64} {
  func.func @_mlp_kernel(%arg0: i32, %arg1: memref<64x100xf32, #tpu.memory_space<vmem>>, %arg2: memref<100x128xf32, #tpu.memory_space<vmem>>, %arg3: memref<1x128xf32, #tpu.memory_space<vmem>>, %arg4: memref<128x64xf32, #tpu.memory_space<vmem>>, %arg5: memref<1x64xf32, #tpu.memory_space<vmem>>, %arg6: memref<64x100xf32, #tpu.memory_space<vmem>>, %arg7: memref<1x100xf32, #tpu.memory_space<vmem>>, %arg8: memref<64x100xf32, #tpu.memory_space<vmem>>) attributes {dimension_semantics = [#tpu.dimension_semantics<parallel>], iteration_bounds = array<i64: 1>, scalar_prefetch = 0 : i64, scratch_operands = 0 : i64, tpu.core_type = #tpu.core_type<tc>, window_params = [{transform_indices = @transform_0, window_bounds = array<i64: 64, 100>}, {pipeline_mode = #tpu.pipeline_mode<synchronous>, transform_indices = @transform_1, window_bounds = array<i64: 100, 128>}, {pipeline_mode = #tpu.pipeline_mode<synchronous>, transform_indices = @transform_2, window_bounds = array<i64: 1, 128>}, {pipeline_mode = #tpu.pipeline_mode<synchronous>, transform_indices = @transform_3, window_bounds = array<i64: 128, 64>}, {pipeline_mode = #tpu.pipeline_mode<synchronous>, transform_indices = @transform_4, window_bounds = array<i64: 1, 64>}, {pipeline_mode = #tpu.pipeline_mode<synchronous>, transform_indices = @transform_5, window_bounds = array<i64: 64, 100>}, {pipeline_mode = #tpu.pipeline_mode<synchronous>, transform_indices = @transform_6, window_bounds = array<i64: 1, 100>}, {transform_indices = @transform_7, window_bounds = array<i64: 64, 100>}]} {
    %c0 = arith.constant 0 : index
    %c0_0 = arith.constant 0 : index
    %0 = vector.load %arg1[%c0, %c0_0] : memref<64x100xf32, #tpu.memory_space<vmem>>, vector<64x100xf32>
    %c0_1 = arith.constant 0 : index
    %c0_2 = arith.constant 0 : index
    %1 = vector.load %arg2[%c0_1, %c0_2] : memref<100x128xf32, #tpu.memory_space<vmem>>, vector<100x128xf32>
    %cst = arith.constant dense<0.000000e+00> : vector<64x128xf32>
    %2 = tpu.matmul %0, %1, %cst {dimension_numbers = #tpu.dot_dimension_numbers<[1], [0], [0], [1], [0, 0, 1, 1], [], []>} : vector<64x100xf32>, vector<100x128xf32>, vector<64x128xf32> -> vector<64x128xf32>
    %c0_3 = arith.constant 0 : index
    %c0_4 = arith.constant 0 : index
    %3 = vector.load %arg3[%c0_3, %c0_4] : memref<1x128xf32, #tpu.memory_space<vmem>>, vector<1x128xf32>
    %4 = vector.broadcast %3 : vector<1x128xf32> to vector<64x128xf32>
    %5 = arith.addf %2, %4 : vector<64x128xf32>
    %cst_5 = arith.constant 0.000000e+00 : f32
    %6 = vector.broadcast %cst_5 : f32 to vector<64x128xf32>
    %7 = arith.maximumf %5, %6 : vector<64x128xf32>
    %c0_6 = arith.constant 0 : index
    %c0_7 = arith.constant 0 : index
    %8 = vector.load %arg4[%c0_6, %c0_7] : memref<128x64xf32, #tpu.memory_space<vmem>>, vector<128x64xf32>
    %cst_8 = arith.constant dense<0.000000e+00> : vector<64x64xf32>
    %9 = tpu.matmul %7, %8, %cst_8 {dimension_numbers = #tpu.dot_dimension_numbers<[1], [0], [0], [1], [0, 0, 1, 1], [], []>} : vector<64x128xf32>, vector<128x64xf32>, vector<64x64xf32> -> vector<64x64xf32>
    %c0_9 = arith.constant 0 : index
    %c0_10 = arith.constant 0 : index
    %10 = vector.load %arg5[%c0_9, %c0_10] : memref<1x64xf32, #tpu.memory_space<vmem>>, vector<1x64xf32>
    %11 = vector.broadcast %10 : vector<1x64xf32> to vector<64x64xf32>
    %12 = arith.addf %9, %11 : vector<64x64xf32>
    %cst_11 = arith.constant 0.000000e+00 : f32
    %13 = vector.broadcast %cst_11 : f32 to vector<64x64xf32>
    %14 = arith.maximumf %12, %13 : vector<64x64xf32>
    %c0_12 = arith.constant 0 : index
    %c0_13 = arith.constant 0 : index
    %15 = vector.load %arg6[%c0_12, %c0_13] : memref<64x100xf32, #tpu.memory_space<vmem>>, vector<64x100xf32>
    %cst_14 = arith.constant dense<0.000000e+00> : vector<64x100xf32>
    %16 = tpu.matmul %14, %15, %cst_14 {dimension_numbers = #tpu.dot_dimension_numbers<[1], [0], [0], [1], [0, 0, 1, 1], [], []>} : vector<64x64xf32>, vector<64x100xf32>, vector<64x100xf32> -> vector<64x100xf32>
    %c0_15 = arith.constant 0 : index
    %c0_16 = arith.constant 0 : index
    %17 = vector.load %arg7[%c0_15, %c0_16] : memref<1x100xf32, #tpu.memory_space<vmem>>, vector<1x100xf32>
    %18 = vector.broadcast %17 : vector<1x100xf32> to vector<64x100xf32>
    %19 = arith.addf %16, %18 : vector<64x100xf32>
    %c0_17 = arith.constant 0 : index
    %c0_18 = arith.constant 0 : index
    %20 = vector.load %arg8[%c0_17, %c0_18] : memref<64x100xf32, #tpu.memory_space<vmem>>, vector<64x100xf32>
    tpu.vector_store %arg8[%c0_17, %c0_18], %19 {strides = array<i32>} : memref<64x100xf32, #tpu.memory_space<vmem>>, vector<64x100xf32>,
    return
  }
  func.func @transform_0(%arg0: i32) -> (i32, i32) {
    %c0_i32 = arith.constant 0 : i32
    %c0_i32_0 = arith.constant 0 : i32
    return %arg0, %c0_i32 : i32, i32
  }
  func.func @transform_1(%arg0: i32) -> (i32, i32) {
    %c0_i32 = arith.constant 0 : i32
    %c0_i32_0 = arith.constant 0 : i32
    %c0_i32_1 = arith.constant 0 : i32
    return %c0_i32, %c0_i32_0 : i32, i32
  }
  func.func @transform_2(%arg0: i32) -> (i32, i32) {
    %c0_i32 = arith.constant 0 : i32
    %c0_i32_0 = arith.constant 0 : i32
    %c0_i32_1 = arith.constant 0 : i32
    return %c0_i32, %c0_i32_0 : i32, i32
  }
  func.func @transform_3(%arg0: i32) -> (i32, i32) {
    %c0_i32 = arith.constant 0 : i32
    %c0_i32_0 = arith.constant 0 : i32
    %c0_i32_1 = arith.constant 0 : i32
    return %c0_i32, %c0_i32_0 : i32, i32
  }
  func.func @transform_4(%arg0: i32) -> (i32, i32) {
    %c0_i32 = arith.constant 0 : i32
    %c0_i32_0 = arith.constant 0 : i32
    %c0_i32_1 = arith.constant 0 : i32
    return %c0_i32, %c0_i32_0 : i32, i32
  }
  func.func @transform_5(%arg0: i32) -> (i32, i32) {
    %c0_i32 = arith.constant 0 : i32
    %c0_i32_0 = arith.constant 0 : i32
    %c0_i32_1 = arith.constant 0 : i32
    return %c0_i32, %c0_i32_0 : i32, i32
  }
  func.func @transform_6(%arg0: i32) -> (i32, i32) {
    %c0_i32 = arith.constant 0 : i32
    %c0_i32_0 = arith.constant 0 : i32
    %c0_i32_1 = arith.constant 0 : i32
    return %c0_i32, %c0_i32_0 : i32, i32
  }
  func.func @transform_7(%arg0: i32) -> (i32, i32) {
    %c0_i32 = arith.constant 0 : i32
    %c0_i32_0 = arith.constant 0 : i32
    return %arg0, %c0_i32 : i32, i32
  }
}

</mosaic_0001>

<llo_original>
// kernel: qry_tower_forward.1
$region0: #{qry_tower_forward.1}
  #allocation0 [shape = 'u32[]', space=smem, size = 0x4, offset = 0x4, fixed_abs, tag = 'smem constant byte address 0x4 - core index']
  #allocation1 [shape = 'u32[144,128]{1,0:T(1,128)}', space=vmem, size = 0x12000, scoped, tag = 'internal scratch']
  %s0 = inlined_call_operand.vmem [shape: f32[64,100], index: 0, kind: input, shape index: {}]
  %s1 = inlined_call_operand.vmem [shape: f32[100,128], index: 1, kind: input, shape index: {}]
  %s2 = inlined_call_operand.vmem [shape: f32[1,128], index: 2, kind: input, shape index: {}]
  %s3 = inlined_call_operand.vmem [shape: f32[128,64], index: 3, kind: input, shape index: {}]
  %s4 = inlined_call_operand.vmem [shape: f32[1,64], index: 4, kind: input, shape index: {}]
  %s5 = inlined_call_operand.hbm [shape: f32[64,100], index: 5, kind: input, shape index: {}]
  %s6 = inlined_call_operand.vmem [shape: f32[1,100], index: 6, kind: input, shape index: {}]
  %s7 = inlined_call_operand.hbm [shape: f32[64,100], index: 7, kind: output, shape index: {}]
  %s8 = sld [smem:[#allocation0]]
  $region42: #{qry_tower_forward.1} parent=0
    _
  %s10 = ssub.s32 1, %s8
  %s11 = scalar_select 0, %s10, %s8
  $region1: #{qry_tower_forward.1} parent=0
    #allocation2 [shape = 'u8[32768]{0}', space=vmem, size = 0x8000, scoped, tag = 'input window, operand 5, single buffered']
    #allocation3 [shape = 's32[1]{0}', space=sflag, size = 0x4, scoped, tag = 'scoped memory for qry_tower_forward.1']
    #allocation4 [shape = 's32[1]{0}', space=sflag, size = 0x4, scoped, tag = 'scoped memory for qry_tower_forward.1']
    #allocation5 [shape = 'u8[32768]{0}', space=vmem, size = 0x8000, scoped, tag = 'output window, operand 0, single buffered']
    %12 = vsyncpa [#allocation3], 0
    %13 = vsyncpa [#allocation4], 0
    // Predicated region
    $region2: #{qry_tower_forward.1} parent=1 // pred_check
      _
    $region3: #{qry_tower_forward.1} parent=1 // pred_check_branch
      %15 = sbr.rel (0) target = $region5
    $region4: #{qry_tower_forward.1} parent=1 // pred_region
      _
    $region5: #{qry_tower_forward.1} parent=1 // pred_fallthru
      _
    // Predicated region
    $region6: #{qry_tower_forward.1} parent=1 // pred_check
      _
    $region7: #{qry_tower_forward.1} parent=1 // pred_check_branch
      %17 = sbr.rel (0) target = $region9
    $region8: #{qry_tower_forward.1} parent=1 // pred_region
      _
    $region9: #{qry_tower_forward.1} parent=1 // pred_fallthru
      _
    // Predicated region
    $region10: #{qry_tower_forward.1} parent=1 // pred_check
      _
    $region11: #{qry_tower_forward.1} parent=1 // pred_check_branch
      %19 = sbr.rel (0) target = $region13
    $region12: #{qry_tower_forward.1} parent=1 // pred_region
      _
    $region13: #{qry_tower_forward.1} parent=1 // pred_fallthru
      _
    // Predicated region
    $region14: #{qry_tower_forward.1} parent=1 // pred_check
      _
    $region15: #{qry_tower_forward.1} parent=1 // pred_check_branch
      %21 = sbr.rel (0) target = $region17
    $region16: #{qry_tower_forward.1} parent=1 // pred_region
      _
    $region17: #{qry_tower_forward.1} parent=1 // pred_fallthru
      _
    // Predicated region
    $region18: #{qry_tower_forward.1} parent=1 // pred_check
      _
    $region19: #{qry_tower_forward.1} parent=1 // pred_check_branch
      %23 = sbr.rel (0) target = $region21
    $region20: #{qry_tower_forward.1} parent=1 // pred_region
      _
    $region21: #{qry_tower_forward.1} parent=1 // pred_fallthru
      _
    // Predicated region
    $region22: #{qry_tower_forward.1} parent=1 // pred_check
      _
    $region23: #{qry_tower_forward.1} parent=1 // pred_check_branch
      %25 = sbr.rel (0) target = $region25
    $region24: #{qry_tower_forward.1} parent=1 // pred_region
      %s27 = ssub.s32 1024, 1024
      %28 = vsyncadd [#allocation3], %s27
      %s29 = sshll.u32 [#allocation2], 4
      %s30 = int_to_ptr.vmem [resolvable:$true] %s29
      %35 = dma.hbm_to_vmem [thread:$0]  %s5, 1024, %s30, [#allocation3], 128, 128, 8
    $region25: #{qry_tower_forward.1} parent=1 // pred_fallthru
      _
    // Predicated region
    $region26: #{qry_tower_forward.1} parent=1 // pred_check
      _
    $region27: #{qry_tower_forward.1} parent=1 // pred_check_branch
      %37 = sbr.rel (0) target = $region29
    $region28: #{qry_tower_forward.1} parent=1 // pred_region
      _
    $region29: #{qry_tower_forward.1} parent=1 // pred_fallthru
      _
    // Predicated region
    $region30: #{qry_tower_forward.1} parent=1 // pred_check
      _
    $region31: #{qry_tower_forward.1} parent=1 // pred_check_branch
      %39 = sbr.rel (0) target = $region33
    $region32: #{qry_tower_forward.1} parent=1 // pred_region
      %40 = dma.done [#allocation3], 1024
    $region33: #{qry_tower_forward.1} parent=1 // pred_fallthru
      _
    %v41 = vld [vmem:[%s0] sm:$0xff]
    %v42 = vld [vmem:[%s0 + $0x8] sm:$0xff]
    %v43 = vld [vmem:[%s0 + $0x10] sm:$0xff]
    %v44 = vld [vmem:[%s0 + $0x18] sm:$0xff]
    %v45 = vld [vmem:[%s0 + $0x20] sm:$0xff]
    %v46 = vld [vmem:[%s0 + $0x28] sm:$0xff]
    %v47 = vld [vmem:[%s0 + $0x30] sm:$0xff]
    %v48 = vld [vmem:[%s0 + $0x38] sm:$0xff]
    %v49 = vld [vmem:[%s1] sm:$0xff]
    %v50 = vld [vmem:[%s1 + $0x8] sm:$0xff]
    %v51 = vld [vmem:[%s1 + $0x10] sm:$0xff]
    %v52 = vld [vmem:[%s1 + $0x18] sm:$0xff]
    %v53 = vld [vmem:[%s1 + $0x20] sm:$0xff]
    %v54 = vld [vmem:[%s1 + $0x28] sm:$0xff]
    %v55 = vld [vmem:[%s1 + $0x30] sm:$0xff]
    %v56 = vld [vmem:[%s1 + $0x38] sm:$0xff]
    %v57 = vld [vmem:[%s1 + $0x40] sm:$0xff]
    %v58 = vld [vmem:[%s1 + $0x48] sm:$0xff]
    %v59 = vld [vmem:[%s1 + $0x50] sm:$0xff]
    %v60 = vld [vmem:[%s1 + $0x58] sm:$0xff]
    %v61 = vld [vmem:[%s1 + $0x60] sm:$0xf]
    %v62 = vld [vmem:[%s2] sm:$0x1]
    %v64 = vlaneseq
    %v65 = vshrl.u32 %v64, 7
    %v66 = vsub.s32 0, %v65
    %v67 = vrot.slane %v62, %v66
    %vm69 = vcmask 818176
    %v71 = vsel %vm69, %v41, 0
    %v74 = vsel %vm69, %v42, 0
    %v77 = vsel %vm69, %v43, 0
    %v80 = vsel %vm69, %v44, 0
    %v83 = vsel %vm69, %v45, 0
    %v86 = vsel %vm69, %v46, 0
    %v89 = vsel %vm69, %v47, 0
    %v92 = vsel %vm69, %v48, 0
    %vm94 = vcmask 1043456
    %v96 = vsel %vm94, %v61, 0
    %98 = vmatprep.subr.mxu0 0.0
    %99 = vmatpush1.msra.mxu0 %v49
    %100 = vmatprep.subr.mxu0 0.0
    %101 = vmatpush1.msra.mxu0 %v50
    %102 = vmatprep.subr.mxu0 0.0
    %103 = vmatpush1.msra.mxu0 %v51
    %104 = vmatprep.subr.mxu0 0.0
    %105 = vmatpush1.msra.mxu0 %v52
    %106 = vmatprep.subr.mxu0 0.0
    %107 = vmatpush1.msra.mxu0 %v53
    %108 = vmatprep.subr.mxu0 0.0
    %109 = vmatpush1.msra.mxu0 %v54
    %110 = vmatprep.subr.mxu0 0.0
    %111 = vmatpush1.msra.mxu0 %v55
    %112 = vmatprep.subr.mxu0 0.0
    %113 = vmatpush1.msra.mxu0 %v56
    %114 = vmatprep.subr.mxu0 0.0
    %115 = vmatpush1.msra.mxu0 %v57
    %116 = vmatprep.subr.mxu0 0.0
    %117 = vmatpush1.msra.mxu0 %v58
    %118 = vmatprep.subr.mxu0 0.0
    %119 = vmatpush1.msra.mxu0 %v59
    %120 = vmatprep.subr.mxu0 0.0
    %121 = vmatpush1.msra.mxu0 %v60
    %122 = vmatprep.subr.mxu0 0.0
    %123 = vmatpush1.msra.mxu0 %v96
    %124 = vmatprep.subr.mxu0 0.0
    %125 = vmatpush1.msra.mxu0 0.0
    %126 = vmatprep.subr.mxu0 0.0
    %127 = vmatpush1.msra.mxu0 0.0
    %128 = vmatprep.subr.mxu0 0.0
    %129 = vmatpush1.msra.mxu0 0.0
    %130 = vmatprep.subr.mxu0 0.0
    %131 = vmatpush1.msra.mxu0 0.0
    %132 = vmatprep.subr.mxu0 0.0
    %133 = vmatpush1.msra.mxu0 0.0
    %134 = vmatprep.subr.mxu0 0.0
    %135 = vmatpush1.msra.mxu0 0.0
    %136 = vmatprep.subr.mxu0 0.0
    %137 = vmatpush1.msra.mxu0 0.0
    %138 = vmatprep.subr.mxu0 0.0
    %139 = vmatpush1.msra.mxu0 0.0
    %140 = vmatprep.subr.mxu0 0.0
    %141 = vmatpush1.msra.mxu0 0.0
    %142 = vmatprep.subr.mxu0 0.0
    %143 = vmatpush1.msra.mxu0 0.0
    %144 = vmatprep.subr.mxu0 0.0
    %145 = vmatpush1.msra.mxu0 0.0
    %146 = vmatprep.subr.mxu0 0.0
    %147 = vmatpush1.msra.mxu0 0.0
    %148 = vmatprep.subr.mxu0 0.0
    %149 = vmatpush1.msra.mxu0 0.0
    %150 = vmatprep.subr.mxu0 0.0
    %151 = vmatpush1.msra.mxu0 0.0
    %152 = vmatprep.subr.mxu0 0.0
    %153 = vmatpush1.msra.mxu0 0.0
    %154 = vmatprep.subr.mxu0 0.0
    %155 = vmatpush1.msra.mxu0 0.0
    %156 = vmatprep.subr.mxu0 0.0
    %157 = vmatpush1.msra.mxu0 0.0
    %158 = vmatprep.subr.mxu0 0.0
    %159 = vmatpush1.msra.mxu0 0.0
    %160 = vmatprep.subr.mxu0 0.0
    %161 = vmatpush1.msra.mxu0 0.0
    %162 = vmatprep.mubr.f32.mxu0 0.0
    %163 = vmatmul.mubr.f32.gmra.mrb[0].mxu0 %v71
    %v164 = vpop.f32.mrb[0].mxu0
    %v165 = vadd.f32 %v67, %v164
    %v166 = vpop.f32.mrb[0].mxu0
    %167 = vmatprep.mubr.f32.mxu0 0.0
    %168 = vmatmul.mubr.f32.gmra.mrb[0].mxu0 %v74
    %v169 = vpop.f32.mrb[0].mxu0
    %v170 = vadd.f32 %v67, %v169
    %v171 = vpop.f32.mrb[0].mxu0
    %172 = vmatprep.mubr.f32.mxu0 0.0
    %173 = vmatmul.mubr.f32.gmra.mrb[0].mxu0 %v77
    %v174 = vpop.f32.mrb[0].mxu0
    %v175 = vadd.f32 %v67, %v174
    %v176 = vpop.f32.mrb[0].mxu0
    %177 = vmatprep.mubr.f32.mxu0 0.0
    %178 = vmatmul.mubr.f32.gmra.mrb[0].mxu0 %v80
    %v179 = vpop.f32.mrb[0].mxu0
    %v180 = vadd.f32 %v67, %v179
    %v181 = vpop.f32.mrb[0].mxu0
    %182 = vmatprep.mubr.f32.mxu0 0.0
    %183 = vmatmul.mubr.f32.gmra.mrb[0].mxu0 %v83
    %v184 = vpop.f32.mrb[0].mxu0
    %v185 = vadd.f32 %v67, %v184
    %v186 = vpop.f32.mrb[0].mxu0
    %187 = vmatprep.mubr.f32.mxu0 0.0
    %188 = vmatmul.mubr.f32.gmra.mrb[0].mxu0 %v86
    %v189 = vpop.f32.mrb[0].mxu0
    %v190 = vadd.f32 %v67, %v189
    %v191 = vpop.f32.mrb[0].mxu0
    %192 = vmatprep.mubr.f32.mxu0 0.0
    %193 = vmatmul.mubr.f32.gmra.mrb[0].mxu0 %v89
    %v194 = vpop.f32.mrb[0].mxu0
    %v195 = vadd.f32 %v67, %v194
    %v196 = vpop.f32.mrb[0].mxu0
    %197 = vmatprep.mubr.f32.mxu0 0.0
    %198 = vmatmul.mubr.f32.gmra.mrb[0].mxu0 %v92
    %v199 = vpop.f32.mrb[0].mxu0
    %v200 = vadd.f32 %v67, %v199
    %v201 = vpop.f32.mrb[0].mxu0
    %202 = vdwg.mxu0
    %v203 = vmax.f32 %v165, 0.0
    %v204 = vmax.f32 %v170, 0.0
    %v205 = vmax.f32 %v175, 0.0
    %v206 = vmax.f32 %v180, 0.0
    %v207 = vmax.f32 %v185, 0.0
    %v208 = vmax.f32 %v190, 0.0
    %v209 = vmax.f32 %v195, 0.0
    %v210 = vmax.f32 %v200, 0.0
    %v211 = vld [vmem:[%s3] sm:$0xff]
    %v212 = vld [vmem:[%s3 + $0x8] sm:$0xff]
    %v213 = vld [vmem:[%s3 + $0x10] sm:$0xff]
    %v214 = vld [vmem:[%s3 + $0x18] sm:$0xff]
    %v215 = vld [vmem:[%s3 + $0x20] sm:$0xff]
    %v216 = vld [vmem:[%s3 + $0x28] sm:$0xff]
    %v217 = vld [vmem:[%s3 + $0x30] sm:$0xff]
    %v218 = vld [vmem:[%s3 + $0x38] sm:$0xff]
    %v219 = vld [vmem:[%s3 + $0x40] sm:$0xff]
    %v220 = vld [vmem:[%s3 + $0x48] sm:$0xff]
    %v221 = vld [vmem:[%s3 + $0x50] sm:$0xff]
    %v222 = vld [vmem:[%s3 + $0x58] sm:$0xff]
    %v223 = vld [vmem:[%s3 + $0x60] sm:$0xff]
    %v224 = vld [vmem:[%s3 + $0x68] sm:$0xff]
    %v225 = vld [vmem:[%s3 + $0x70] sm:$0xff]
    %v226 = vld [vmem:[%s3 + $0x78] sm:$0xff]
    %v227 = vld [vmem:[%s4] sm:$0x1]
    %v229 = vlaneseq
    %v230 = vshrl.u32 %v229, 7
    %v231 = vsub.s32 0, %v230
    %v232 = vrot.slane %v227, %v231
    %234 = vmatprep.subr.mxu0 0.0
    %235 = vmatpush1.msra.mxu0 %v211
    %236 = vmatprep.subr.mxu0 0.0
    %237 = vmatpush1.msra.mxu0 %v212
    %238 = vmatprep.subr.mxu0 0.0
    %239 = vmatpush1.msra.mxu0 %v213
    %240 = vmatprep.subr.mxu0 0.0
    %241 = vmatpush1.msra.mxu0 %v214
    %242 = vmatprep.subr.mxu0 0.0
    %243 = vmatpush1.msra.mxu0 %v215
    %244 = vmatprep.subr.mxu0 0.0
    %245 = vmatpush1.msra.mxu0 %v216
    %246 = vmatprep.subr.mxu0 0.0
    %247 = vmatpush1.msra.mxu0 %v217
    %248 = vmatprep.subr.mxu0 0.0
    %249 = vmatpush1.msra.mxu0 %v218
    %250 = vmatprep.subr.mxu0 0.0
    %251 = vmatpush1.msra.mxu0 %v219
    %252 = vmatprep.subr.mxu0 0.0
    %253 = vmatpush1.msra.mxu0 %v220
    %254 = vmatprep.subr.mxu0 0.0
    %255 = vmatpush1.msra.mxu0 %v221
    %256 = vmatprep.subr.mxu0 0.0
    %257 = vmatpush1.msra.mxu0 %v222
    %258 = vmatprep.subr.mxu0 0.0
    %259 = vmatpush1.msra.mxu0 %v223
    %260 = vmatprep.subr.mxu0 0.0
    %261 = vmatpush1.msra.mxu0 %v224
    %262 = vmatprep.subr.mxu0 0.0
    %263 = vmatpush1.msra.mxu0 %v225
    %264 = vmatprep.subr.mxu0 0.0
    %265 = vmatpush1.msra.mxu0 %v226
    %266 = vmatprep.subr.mxu0 0.0
    %267 = vmatpush1.msra.mxu0 0.0
    %268 = vmatprep.subr.mxu0 0.0
    %269 = vmatpush1.msra.mxu0 0.0
    %270 = vmatprep.subr.mxu0 0.0
    %271 = vmatpush1.msra.mxu0 0.0
    %272 = vmatprep.subr.mxu0 0.0
    %273 = vmatpush1.msra.mxu0 0.0
    %274 = vmatprep.subr.mxu0 0.0
    %275 = vmatpush1.msra.mxu0 0.0
    %276 = vmatprep.subr.mxu0 0.0
    %277 = vmatpush1.msra.mxu0 0.0
    %278 = vmatprep.subr.mxu0 0.0
    %279 = vmatpush1.msra.mxu0 0.0
    %280 = vmatprep.subr.mxu0 0.0
    %281 = vmatpush1.msra.mxu0 0.0
    %282 = vmatprep.subr.mxu0 0.0
    %283 = vmatpush1.msra.mxu0 0.0
    %284 = vmatprep.subr.mxu0 0.0
    %285 = vmatpush1.msra.mxu0 0.0
    %286 = vmatprep.subr.mxu0 0.0
    %287 = vmatpush1.msra.mxu0 0.0
    %288 = vmatprep.subr.mxu0 0.0
    %289 = vmatpush1.msra.mxu0 0.0
    %290 = vmatprep.subr.mxu0 0.0
    %291 = vmatpush1.msra.mxu0 0.0
    %292 = vmatprep.subr.mxu0 0.0
    %293 = vmatpush1.msra.mxu0 0.0
    %294 = vmatprep.subr.mxu0 0.0
    %295 = vmatpush1.msra.mxu0 0.0
    %296 = vmatprep.subr.mxu0 0.0
    %297 = vmatpush1.msra.mxu0 0.0
    %298 = vmatprep.mubr.f32.mxu0 0.0
    %299 = vmatmul.mubr.f32.gmra.mrb[0].mxu0 %v203
    %v300 = vpop.f32.mrb[0].mxu0
    %v301 = vadd.f32 %v232, %v300
    %v302 = vpop.f32.mrb[0].mxu0
    %303 = vmatprep.mubr.f32.mxu0 0.0
    %304 = vmatmul.mubr.f32.gmra.mrb[0].mxu0 %v204
    %v305 = vpop.f32.mrb[0].mxu0
    %v306 = vadd.f32 %v232, %v305
    %v307 = vpop.f32.mrb[0].mxu0
    %308 = vmatprep.mubr.f32.mxu0 0.0
    %309 = vmatmul.mubr.f32.gmra.mrb[0].mxu0 %v205
    %v310 = vpop.f32.mrb[0].mxu0
    %v311 = vadd.f32 %v232, %v310
    %v312 = vpop.f32.mrb[0].mxu0
    %313 = vmatprep.mubr.f32.mxu0 0.0
    %314 = vmatmul.mubr.f32.gmra.mrb[0].mxu0 %v206
    %v315 = vpop.f32.mrb[0].mxu0
    %v316 = vadd.f32 %v232, %v315
    %v317 = vpop.f32.mrb[0].mxu0
    %318 = vmatprep.mubr.f32.mxu0 0.0
    %319 = vmatmul.mubr.f32.gmra.mrb[0].mxu0 %v207
    %v320 = vpop.f32.mrb[0].mxu0
    %v321 = vadd.f32 %v232, %v320
    %v322 = vpop.f32.mrb[0].mxu0
    %323 = vmatprep.mubr.f32.mxu0 0.0
    %324 = vmatmul.mubr.f32.gmra.mrb[0].mxu0 %v208
    %v325 = vpop.f32.mrb[0].mxu0
    %v326 = vadd.f32 %v232, %v325
    %v327 = vpop.f32.mrb[0].mxu0
    %328 = vmatprep.mubr.f32.mxu0 0.0
    %329 = vmatmul.mubr.f32.gmra.mrb[0].mxu0 %v209
    %v330 = vpop.f32.mrb[0].mxu0
    %v331 = vadd.f32 %v232, %v330
    %v332 = vpop.f32.mrb[0].mxu0
    %333 = vmatprep.mubr.f32.mxu0 0.0
    %334 = vmatmul.mubr.f32.gmra.mrb[0].mxu0 %v210
    %v335 = vpop.f32.mrb[0].mxu0
    %v336 = vadd.f32 %v232, %v335
    %v337 = vpop.f32.mrb[0].mxu0
    %338 = vdwg.mxu0
    %v339 = vmax.f32 %v301, 0.0
    %v340 = vmax.f32 %v306, 0.0
    %v341 = vmax.f32 %v311, 0.0
    %v342 = vmax.f32 %v316, 0.0
    %v343 = vmax.f32 %v321, 0.0
    %v344 = vmax.f32 %v326, 0.0
    %v345 = vmax.f32 %v331, 0.0
    %v346 = vmax.f32 %v336, 0.0
    %v347 = vld [vmem:[#allocation2] sm:$0xff]
    %v348 = vld [vmem:[#allocation2 + $0x8] sm:$0xff]
    %v349 = vld [vmem:[#allocation2 + $0x10] sm:$0xff]
    %v350 = vld [vmem:[#allocation2 + $0x18] sm:$0xff]
    %v351 = vld [vmem:[#allocation2 + $0x20] sm:$0xff]
    %v352 = vld [vmem:[#allocation2 + $0x28] sm:$0xff]
    %v353 = vld [vmem:[#allocation2 + $0x30] sm:$0xff]
    %v354 = vld [vmem:[#allocation2 + $0x38] sm:$0xff]
    %v355 = vld [vmem:[%s6] sm:$0x1]
    %v357 = vlaneseq
    %v358 = vshrl.u32 %v357, 7
    %v359 = vsub.s32 0, %v358
    %v360 = vrot.slane %v355, %v359
    %vm362 = vcmask 523264
    %v364 = vsel %vm362, %v339, 0
    %v367 = vsel %vm362, %v340, 0
    %v370 = vsel %vm362, %v341, 0
    %v373 = vsel %vm362, %v342, 0
    %v376 = vsel %vm362, %v343, 0
    %v379 = vsel %vm362, %v344, 0
    %v382 = vsel %vm362, %v345, 0
    %v385 = vsel %vm362, %v346, 0
    %387 = vmatprep.subr.mxu0 0.0
    %388 = vmatpush1.msra.mxu0 %v347
    %389 = vmatprep.subr.mxu0 0.0
    %390 = vmatpush1.msra.mxu0 %v348
    %391 = vmatprep.subr.mxu0 0.0
    %392 = vmatpush1.msra.mxu0 %v349
    %393 = vmatprep.subr.mxu0 0.0
    %394 = vmatpush1.msra.mxu0 %v350
    %395 = vmatprep.subr.mxu0 0.0
    %396 = vmatpush1.msra.mxu0 %v351
    %397 = vmatprep.subr.mxu0 0.0
    %398 = vmatpush1.msra.mxu0 %v352
    %399 = vmatprep.subr.mxu0 0.0
    %400 = vmatpush1.msra.mxu0 %v353
    %401 = vmatprep.subr.mxu0 0.0
    %402 = vmatpush1.msra.mxu0 %v354
    %403 = vmatprep.subr.mxu0 0.0
    %404 = vmatpush1.msra.mxu0 0.0
    %405 = vmatprep.subr.mxu0 0.0
    %406 = vmatpush1.msra.mxu0 0.0
    %407 = vmatprep.subr.mxu0 0.0
    %408 = vmatpush1.msra.mxu0 0.0
    %409 = vmatprep.subr.mxu0 0.0
    %410 = vmatpush1.msra.mxu0 0.0
    %411 = vmatprep.subr.mxu0 0.0
    %412 = vmatpush1.msra.mxu0 0.0
    %413 = vmatprep.subr.mxu0 0.0
    %414 = vmatpush1.msra.mxu0 0.0
    %415 = vmatprep.subr.mxu0 0.0
    %416 = vmatpush1.msra.mxu0 0.0
    %417 = vmatprep.subr.mxu0 0.0
    %418 = vmatpush1.msra.mxu0 0.0
    %419 = vmatprep.subr.mxu0 0.0
    %420 = vmatpush1.msra.mxu0 0.0
    %421 = vmatprep.subr.mxu0 0.0
    %422 = vmatpush1.msra.mxu0 0.0
    %423 = vmatprep.subr.mxu0 0.0
    %424 = vmatpush1.msra.mxu0 0.0
    %425 = vmatprep.subr.mxu0 0.0
    %426 = vmatpush1.msra.mxu0 0.0
    %427 = vmatprep.subr.mxu0 0.0
    %428 = vmatpush1.msra.mxu0 0.0
    %429 = vmatprep.subr.mxu0 0.0
    %430 = vmatpush1.msra.mxu0 0.0
    %431 = vmatprep.subr.mxu0 0.0
    %432 = vmatpush1.msra.mxu0 0.0
    %433 = vmatprep.subr.mxu0 0.0
    %434 = vmatpush1.msra.mxu0 0.0
    %435 = vmatprep.subr.mxu0 0.0
    %436 = vmatpush1.msra.mxu0 0.0
    %437 = vmatprep.subr.mxu0 0.0
    %438 = vmatpush1.msra.mxu0 0.0
    %439 = vmatprep.subr.mxu0 0.0
    %440 = vmatpush1.msra.mxu0 0.0
    %441 = vmatprep.subr.mxu0 0.0
    %442 = vmatpush1.msra.mxu0 0.0
    %443 = vmatprep.subr.mxu0 0.0
    %444 = vmatpush1.msra.mxu0 0.0
    %445 = vmatprep.subr.mxu0 0.0
    %446 = vmatpush1.msra.mxu0 0.0
    %447 = vmatprep.subr.mxu0 0.0
    %448 = vmatpush1.msra.mxu0 0.0
    %449 = vmatprep.subr.mxu0 0.0
    %450 = vmatpush1.msra.mxu0 0.0
    %451 = vmatprep.mubr.f32.mxu0 0.0
    %452 = vmatmul.mubr.f32.gmra.mrb[0].mxu0 %v364
    %v453 = vpop.f32.mrb[0].mxu0
    %v454 = vadd.f32 %v360, %v453
    %v455 = vpop.f32.mrb[0].mxu0
    %456 = vmatprep.mubr.f32.mxu0 0.0
    %457 = vmatmul.mubr.f32.gmra.mrb[0].mxu0 %v367
    %v458 = vpop.f32.mrb[0].mxu0
    %v459 = vadd.f32 %v360, %v458
    %v460 = vpop.f32.mrb[0].mxu0
    %461 = vmatprep.mubr.f32.mxu0 0.0
    %462 = vmatmul.mubr.f32.gmra.mrb[0].mxu0 %v370
    %v463 = vpop.f32.mrb[0].mxu0
    %v464 = vadd.f32 %v360, %v463
    %v465 = vpop.f32.mrb[0].mxu0
    %466 = vmatprep.mubr.f32.mxu0 0.0
    %467 = vmatmul.mubr.f32.gmra.mrb[0].mxu0 %v373
    %v468 = vpop.f32.mrb[0].mxu0
    %v469 = vadd.f32 %v360, %v468
    %v470 = vpop.f32.mrb[0].mxu0
    %471 = vmatprep.mubr.f32.mxu0 0.0
    %472 = vmatmul.mubr.f32.gmra.mrb[0].mxu0 %v376
    %v473 = vpop.f32.mrb[0].mxu0
    %v474 = vadd.f32 %v360, %v473
    %v475 = vpop.f32.mrb[0].mxu0
    %476 = vmatprep.mubr.f32.mxu0 0.0
    %477 = vmatmul.mubr.f32.gmra.mrb[0].mxu0 %v379
    %v478 = vpop.f32.mrb[0].mxu0
    %v479 = vadd.f32 %v360, %v478
    %v480 = vpop.f32.mrb[0].mxu0
    %481 = vmatprep.mubr.f32.mxu0 0.0
    %482 = vmatmul.mubr.f32.gmra.mrb[0].mxu0 %v382
    %v483 = vpop.f32.mrb[0].mxu0
    %v484 = vadd.f32 %v360, %v483
    %v485 = vpop.f32.mrb[0].mxu0
    %486 = vmatprep.mubr.f32.mxu0 0.0
    %487 = vmatmul.mubr.f32.gmra.mrb[0].mxu0 %v385
    %v488 = vpop.f32.mrb[0].mxu0
    %v489 = vadd.f32 %v360, %v488
    %v490 = vpop.f32.mrb[0].mxu0
    %491 = vdwg.mxu0
    %492 = vst.msk [vmem:[#allocation5] sm:$0xff] %vm69, %v454
    %493 = vst.msk [vmem:[#allocation5 + $0x8] sm:$0xff] %vm69, %v459
    %494 = vst.msk [vmem:[#allocation5 + $0x10] sm:$0xff] %vm69, %v464
    %495 = vst.msk [vmem:[#allocation5 + $0x18] sm:$0xff] %vm69, %v469
    %496 = vst.msk [vmem:[#allocation5 + $0x20] sm:$0xff] %vm69, %v474
    %497 = vst.msk [vmem:[#allocation5 + $0x28] sm:$0xff] %vm69, %v479
    %498 = vst.msk [vmem:[#allocation5 + $0x30] sm:$0xff] %vm69, %v484
    %499 = vst.msk [vmem:[#allocation5 + $0x38] sm:$0xff] %vm69, %v489
    // Predicated region
    $region34: #{qry_tower_forward.1} parent=1 // pred_check
      _
    $region35: #{qry_tower_forward.1} parent=1 // pred_check_branch
      %501 = sbr.rel (0) target = $region37
    $region36: #{qry_tower_forward.1} parent=1 // pred_region
      %s503 = ssub.s32 1024, 1024
      %504 = vsyncadd [#allocation4], %s503
      %s505 = sshll.u32 [#allocation5], 4
      %s506 = int_to_ptr.vmem [resolvable:$true] %s505
      %511 = dma.vmem_to_hbm [thread:$0]  %s506, 1024, %s7, [#allocation4], 128, 128, 8
    $region37: #{qry_tower_forward.1} parent=1 // pred_fallthru
      _
    // Predicated region
    $region38: #{qry_tower_forward.1} parent=1 // pred_check
      _
    $region39: #{qry_tower_forward.1} parent=1 // pred_check_branch
      %513 = sbr.rel (0) target = $region41
    $region40: #{qry_tower_forward.1} parent=1 // pred_region
      %514 = dma.done [#allocation4], 1024
    $region41: #{qry_tower_forward.1} parent=1 // pred_fallthru
      _
    %515 = vsyncpa [#allocation3], 1
    %516 = vsyncpa [#allocation4], 1

</llo_original>
